<compile_context>
chip_gen: v5e
topology: v5e:2x2
jax: 0.10.0
libtpu: 0.0.40
codegen_flags: <defaults>
</compile_context>

<pallas_src>
import functools

import numpy as np
import jax
import jax.numpy as jnp
from jax import lax
from jax.experimental import pallas as pl
from jax.experimental.pallas import tpu as pltpu

IGNORE_TOKEN_ID = -100
NEG_INF = -1e9  # plain python float -> inlined literal, never a captured jax constant


def listmle_kernel(gh_ref, te_ref, inv_ref, logits_ref, loss_ref, *, batch, block_b):
    """One batch-block of ListMLE.

    gh_ref     : (TB, n, H)  hidden states gathered at the n valid label positions
    te_ref     : (TB, n, H)  candidate text embeddings
    inv_ref    : (TB, 1, n)  inv[c] = listwise step at which candidate c is the target
    logits_ref : (TB, n, n)  masked logits [step, candidate]  (module output)
    loss_ref   : (1, 8, 128) block partial sum of (lse - target) splatted lane-dense
    """
    gh = gh_ref[...]
    te = te_ref[...]
    inv = inv_ref[...]                      # (TB, 1, n) int32
    tb, n, _ = gh.shape

    # scores[b, step, candidate] = <hidden[b, step], emb[b, candidate]>  (MXU, f32 acc)
    scores = jnp.einsum("bsh,bch->bsc", gh, te,
                        preferred_element_type=jnp.float32)        # (TB, n, n) f32

    step = lax.broadcasted_iota(jnp.int32, (tb, n, n), 1)           # listwise step per row
    allowed = inv >= step           # candidate not yet consumed at this step
    sel = inv == step               # candidate is the target of this step

    masked = jnp.where(allowed, scores, NEG_INF)                    # (TB, n, n) f32
    logits_ref[...] = masked.astype(logits_ref.dtype)

    # per-step cross entropy: lse(masked) - masked[target]  (stable, f32)
    m = jnp.max(masked, axis=-1, keepdims=True)
    z = masked - m
    lse = jnp.log(jnp.sum(jnp.exp(z), axis=-1))                     # (TB, n)
    tgt = jnp.sum(jnp.where(sel, z, 0.0), axis=-1)                  # (TB, n)
    lp = lse - tgt                                                  # (TB, n)

    # zero rows that came from batch padding, then reduce the block to one scalar
    row = pl.program_id(0) * block_b + lax.broadcasted_iota(jnp.int32, (tb, n), 0)
    lp = jnp.where(row < batch, lp, 0.0)
    block_sum = jnp.sum(lp)
    loss_ref[...] = jnp.full(loss_ref.shape, block_sum, dtype=loss_ref.dtype)


def listmle_pallas(gathered_hidden, text_embeddings, inv, *, block_b=None):
    B, n, H = gathered_hidden.shape
    in_itemsize = int(gathered_hidden.dtype.itemsize)

    if block_b is None:
        # keep the double-buffered VMEM footprint modest on every generation
        # (v7x has only 64 MiB physical / 32 MiB default scoped VMEM)
        per_row = (2 * n * H * in_itemsize          # gh + te blocks
                   + n * n * (in_itemsize + 4)      # logits out + f32 scores scratch
                   + n * 4)                         # inv
        block_b = max(1, min(B, (4 * 1024 * 1024) // max(per_row, 1), 512))
    TB = int(block_b)
    nblocks = (B + TB - 1) // TB
    Bp = nblocks * TB

    if Bp != B:
        pad = Bp - B
        gathered_hidden = jnp.pad(gathered_hidden, ((0, pad), (0, 0), (0, 0)))
        text_embeddings = jnp.pad(text_embeddings, ((0, pad), (0, 0), (0, 0)))
        inv = jnp.pad(inv, ((0, pad), (0, 0)))
    inv3 = inv.reshape(Bp, 1, n).astype(jnp.int32)

    kernel = functools.partial(listmle_kernel, batch=B, block_b=TB)

    masked_logits, partial = pl.pallas_call(
        kernel,
        out_shape=(jax.ShapeDtypeStruct((Bp, n, n), gathered_hidden.dtype),
                   jax.ShapeDtypeStruct((nblocks, 8, 128), jnp.float32)),
        grid=(nblocks,),
        in_specs=[pl.BlockSpec((TB, n, H), lambda b: (b, 0, 0)),
                  pl.BlockSpec((TB, n, H), lambda b: (b, 0, 0)),
                  pl.BlockSpec((TB, 1, n), lambda b: (b, 0, 0))],
        out_specs=(pl.BlockSpec((TB, n, n), lambda b: (b, 0, 0)),
                   pl.BlockSpec((1, 8, 128), lambda b: (b, 0, 0))),
        compiler_params=pltpu.CompilerParams(
            dimension_semantics=("parallel",),
            vmem_limit_bytes=32 * 1024 * 1024),
    )(gathered_hidden, text_embeddings, inv3)

    loss = jnp.sum(partial[:, 0, 0]) / jnp.float32(B * n)
    return masked_logits[:B].astype(jnp.float32), loss


def listmle_loss(hidden_states, text_embeddings, labels, ranking):
    B, S, H = hidden_states.shape
    n = ranking.shape[-1]

    # inv[c] = step at which candidate c is the target.  argsort is invariant to the
    # 0-based vs 1-based `_rank_minus_one` normalisation of the original module.
    inv = jnp.argsort(ranking.astype(jnp.int32), axis=-1).astype(jnp.int32)   # (B, n)

    # locate the n non-ignored positions of shift_labels = labels[:, 1:] per row, in order.
    # TODO(synk): the data-dependent row gather stays in plain JAX; fusing it into the
    # kernel (scalar-prefetched indices + manual DMA) would save one (B, n, H) HBM
    # round-trip but fragments the batched MXU einsum into tiny per-row matmuls.
    Sm1 = S - 1
    shift_labels = labels[:, 1:]
    valid = shift_labels != IGNORE_TOKEN_ID
    key = jnp.where(valid, jnp.arange(Sm1, dtype=jnp.int32)[None, :], Sm1)
    idx = jnp.argsort(key, axis=-1)[:, :n]                                     # (B, n)

    # logits[:, t] uses hidden_states[:, t]; shift_logits row t pairs with labels[:, t+1]
    gathered_hidden = jnp.take_along_axis(hidden_states[:, :Sm1, :],
                                          idx[:, :, None], axis=1)             # (B, n, H)

    masked_logits, loss = listmle_pallas(gathered_hidden, text_embeddings, inv)
    return loss, masked_logits.reshape(B, n, -1)


def reference_numpy(hidden_states, text_embeddings, labels, ranking):
    hs = np.asarray(hidden_states, np.float32)
    te = np.asarray(text_embeddings, np.float32)
    lab = np.asarray(labels)
    rk = np.asarray(ranking)
    B, S, H = hs.shape
    n = rk.shape[-1]
    if rk.min() == 1:
        rk = rk - 1
    logits = hs @ te.transpose(0, 2, 1)            # (B, S, n)
    shift_logits = logits[:, :-1, :].copy()
    shift_labels = lab[:, 1:]
    out_logits = np.zeros((B, n, n), np.float32)
    lps = []
    for b in range(B):
        pos = np.nonzero(shift_labels[b] != IGNORE_TOKEN_ID)[0]
        sl = shift_logits[b, pos]                  # (n, n)
        inv = np.argsort(rk[b])                    # step at which candidate c is chosen
        step = np.arange(n)[:, None]
        allowed = inv[None, :] >= step
        sl = np.where(allowed, sl, np.float32(-1e9)).astype(np.float32)
        out_logits[b] = sl
        m = sl.max(-1, keepdims=True)
        z = sl - m
        lse = np.log(np.exp(z).sum(-1))
        tgt = z[np.arange(n), rk[b]]
        lps.append(lse - tgt)
    lp = np.stack(lps)
    return np.float32(lp.mean()), out_logits


if __name__ == "__main__":
    B, S, H, n = 2, 12, 32, 8
    key = jax.random.PRNGKey(0)
    k1, k2, k3 = jax.random.split(key, 3)

    hidden_states = jax.random.normal(k1, (B, S, H), dtype=jnp.float32)
    text_embeddings = jax.random.normal(k2, (B, n, H), dtype=jnp.float32)

    # labels: exactly n non-ignored positions per row inside labels[:, 1:]
    labels = jnp.full((B, S), IGNORE_TOKEN_ID, dtype=jnp.int32)
    valid_pos = jnp.array([[2, 3, 5, 6, 7, 8, 10, 11],
                           [1, 2, 3, 4, 6, 8, 9, 11]], dtype=jnp.int32)
    labels = labels.at[jnp.arange(B)[:, None], valid_pos].set(7)

    # ranking: 1-based permutation per row (exercises the rank-minus-one path)
    ranking = jnp.stack([
        jax.random.permutation(k3, n) + 1,
        jax.random.permutation(jax.random.fold_in(k3, 1), n) + 1,
    ]).astype(jnp.int32)

    loss, out_logits = listmle_loss(hidden_states, text_embeddings, labels, ranking)
    loss = jax.block_until_ready(loss)
    out_logits = jax.block_until_ready(out_logits)

    ref_loss, ref_logits = reference_numpy(hidden_states, text_embeddings, labels, ranking)
    np.testing.assert_allclose(np.asarray(out_logits), ref_logits, rtol=1e-2, atol=1e-2)
    np.testing.assert_allclose(np.asarray(loss), ref_loss, rtol=1e-2, atol=1e-2)

    print("KERNEL_OK")
</pallas_src>

<mosaic_0001>
module attributes {stable_mosaic.version = 11 : i64} {
  func.func @listmle_kernel(%arg0: i32, %arg1: memref<2x8x32xf32, #tpu.memory_space<vmem>>, %arg2: memref<2x8x32xf32, #tpu.memory_space<vmem>>, %arg3: memref<2x1x8xi32, #tpu.memory_space<vmem>>, %arg4: memref<2x8x8xf32, #tpu.memory_space<vmem>>, %arg5: memref<1x8x128xf32, #tpu.memory_space<vmem>>) attributes {dimension_semantics = [#tpu.dimension_semantics<parallel>], iteration_bounds = array<i64: 1>, scalar_prefetch = 0 : i64, scratch_operands = 0 : i64, tpu.core_type = #tpu.core_type<tc>, window_params = [{transform_indices = @transform_0, window_bounds = array<i64: 2, 8, 32>}, {transform_indices = @transform_1, window_bounds = array<i64: 2, 8, 32>}, {transform_indices = @transform_2, window_bounds = array<i64: 2, 1, 8>}, {transform_indices = @transform_3, window_bounds = array<i64: 2, 8, 8>}, {transform_indices = @transform_4, window_bounds = array<i64: 1, 8, 128>}]} {
    %c0 = arith.constant 0 : index
    %c0_0 = arith.constant 0 : index
    %c0_1 = arith.constant 0 : index
    %0 = vector.load %arg1[%c0, %c0_0, %c0_1] : memref<2x8x32xf32, #tpu.memory_space<vmem>>, vector<2x8x32xf32>
    %c0_2 = arith.constant 0 : index
    %c0_3 = arith.constant 0 : index
    %c0_4 = arith.constant 0 : index
    %1 = vector.load %arg2[%c0_2, %c0_3, %c0_4] : memref<2x8x32xf32, #tpu.memory_space<vmem>>, vector<2x8x32xf32>
    %c0_5 = arith.constant 0 : index
    %c0_6 = arith.constant 0 : index
    %c0_7 = arith.constant 0 : index
    %2 = vector.load %arg3[%c0_5, %c0_6, %c0_7] : memref<2x1x8xi32, #tpu.memory_space<vmem>>, vector<2x1x8xi32>
    "tpu.trace_start"() <{level = 10 : i32, message = "bsh,bch->bsc"}> : () -> ()
    %cst = arith.constant dense<0.000000e+00> : vector<2x8x8xf32>
    %3 = tpu.matmul %0, %1, %cst {dimension_numbers = #tpu.dot_dimension_numbers<[2], [2], [1], [1], [0, 0, 0, 1, 1, 1], [0], [0]>} : vector<2x8x32xf32>, vector<2x8x32xf32>, vector<2x8x8xf32> -> vector<2x8x8xf32>
    "tpu.trace_stop"() : () -> ()
    %4 = tpu.iota {dimensions = array<i32: 1>} : vector<2x8x8xi32>
    %5 = vector.broadcast %2 : vector<2x1x8xi32> to vector<2x8x8xi32>
    %6 = arith.cmpi sge, %5, %4 : vector<2x8x8xi32>
    %7 = vector.broadcast %2 : vector<2x1x8xi32> to vector<2x8x8xi32>
    %8 = arith.cmpi eq, %7, %4 : vector<2x8x8xi32>
    %cst_8 = arith.constant -1.000000e+09 : f32
    %9 = vector.broadcast %cst_8 : f32 to vector<2x8x8xf32>
    %10 = arith.select %6, %3, %9 : vector<2x8x8xi1>, vector<2x8x8xf32>
    %c0_9 = arith.constant 0 : index
    %c0_10 = arith.constant 0 : index
    %c0_11 = arith.constant 0 : index
    %11 = vector.load %arg4[%c0_9, %c0_10, %c0_11] : memref<2x8x8xf32, #tpu.memory_space<vmem>>, vector<2x8x8xf32>
    tpu.vector_store %arg4[%c0_9, %c0_10, %c0_11], %10 {strides = array<i32>} : memref<2x8x8xf32, #tpu.memory_space<vmem>>, vector<2x8x8xf32>,
    %cst_12 = arith.constant dense<0xFF800000> : vector<2x8xf32>
    %12 = vector.multi_reduction <maximumf>, %10, %cst_12 [2] : vector<2x8x8xf32> to vector<2x8xf32>
    %13 = vector.shape_cast %12 : vector<2x8xf32> to vector<2x8x1xf32>
    %14 = vector.broadcast %13 : vector<2x8x1xf32> to vector<2x8x8xf32>
    %15 = arith.subf %10, %14 : vector<2x8x8xf32>
    %16 = math.exp %15 : vector<2x8x8xf32>
    %cst_13 = arith.constant dense<0.000000e+00> : vector<2x8xf32>
    %17 = vector.multi_reduction <add>, %16, %cst_13 [2] : vector<2x8x8xf32> to vector<2x8xf32>
    %18 = math.log %17 : vector<2x8xf32>
    %cst_14 = arith.constant 0.000000e+00 : f32
    %19 = vector.broadcast %cst_14 : f32 to vector<2x8x8xf32>
    %20 = arith.select %8, %15, %19 : vector<2x8x8xi1>, vector<2x8x8xf32>
    %cst_15 = arith.constant dense<0.000000e+00> : vector<2x8xf32>
    %21 = vector.multi_reduction <add>, %20, %cst_15 [2] : vector<2x8x8xf32> to vector<2x8xf32>
    %22 = arith.subf %18, %21 : vector<2x8xf32>
    %c2_i32 = arith.constant 2 : i32
    %23 = arith.muli %arg0, %c2_i32 : i32
    %24 = tpu.iota {dimensions = array<i32: 0>} : vector<2x8xi32>
    %25 = vector.broadcast %23 : i32 to vector<2x8xi32>
    %26 = arith.addi %25, %24 : vector<2x8xi32>
    %c2_i32_16 = arith.constant 2 : i32
    %27 = vector.broadcast %c2_i32_16 : i32 to vector<2x8xi32>
    %28 = arith.cmpi slt, %26, %27 : vector<2x8xi32>
    %cst_17 = arith.constant 0.000000e+00 : f32
    %29 = vector.broadcast %cst_17 : f32 to vector<2x8xf32>
    %30 = arith.select %28, %22, %29 : vector<2x8xi1>, vector<2x8xf32>
    %31 = vector.shape_cast %30 : vector<2x8xf32> to vector<1x2x8xf32>
    %cst_18 = arith.constant dense<0.000000e+00> : vector<1xf32>
    %32 = vector.multi_reduction <add>, %31, %cst_18 [1, 2] : vector<1x2x8xf32> to vector<1xf32>
    %33 = vector.shape_cast %32 : vector<1xf32> to vector<1x1x1xf32>
    %34 = vector.extract %33[0, 0, 0] : f32 from vector<1x1x1xf32>
    %35 = vector.broadcast %34 : f32 to vector<1x8x128xf32>
    %c0_19 = arith.constant 0 : index
    %c0_20 = arith.constant 0 : index
    %c0_21 = arith.constant 0 : index
    %36 = vector.load %arg5[%c0_19, %c0_20, %c0_21] : memref<1x8x128xf32, #tpu.memory_space<vmem>>, vector<1x8x128xf32>
    tpu.vector_store %arg5[%c0_19, %c0_20, %c0_21], %35 {strides = array<i32>} : memref<1x8x128xf32, #tpu.memory_space<vmem>>, vector<1x8x128xf32>,
    return
  }
  func.func @transform_0(%arg0: i32) -> (i32, i32, i32) {
    %c0_i32 = arith.constant 0 : i32
    %c0_i32_0 = arith.constant 0 : i32
    %c0_i32_1 = arith.constant 0 : i32
    return %arg0, %c0_i32, %c0_i32_0 : i32, i32, i32
  }
  func.func @transform_1(%arg0: i32) -> (i32, i32, i32) {
    %c0_i32 = arith.constant 0 : i32
    %c0_i32_0 = arith.constant 0 : i32
    %c0_i32_1 = arith.constant 0 : i32
    return %arg0, %c0_i32, %c0_i32_0 : i32, i32, i32
  }
  func.func @transform_2(%arg0: i32) -> (i32, i32, i32) {
    %c0_i32 = arith.constant 0 : i32
    %c0_i32_0 = arith.constant 0 : i32
    %c0_i32_1 = arith.constant 0 : i32
    return %arg0, %c0_i32, %c0_i32_0 : i32, i32, i32
  }
  func.func @transform_3(%arg0: i32) -> (i32, i32, i32) {
    %c0_i32 = arith.constant 0 : i32
    %c0_i32_0 = arith.constant 0 : i32
    %c0_i32_1 = arith.constant 0 : i32
    return %arg0, %c0_i32, %c0_i32_0 : i32, i32, i32
  }
  func.func @transform_4(%arg0: i32) -> (i32, i32, i32) {
    %c0_i32 = arith.constant 0 : i32
    %c0_i32_0 = arith.constant 0 : i32
    %c0_i32_1 = arith.constant 0 : i32
    return %arg0, %c0_i32, %c0_i32_0 : i32, i32, i32
  }
}

</mosaic_0001>

<llo_original>
// kernel: tpu_custom_call.1
$region0: #{tpu_custom_call.1}
  #allocation0 [shape = 'u32[]', space=smem, size = 0x4, offset = 0x4, fixed_abs, tag = 'smem constant byte address 0x4 - core index']
  #allocation1 [shape = 'u32[72,128]{1,0:T(1,128)}', space=vmem, size = 0x9000, scoped, tag = 'internal scratch']
  %s0 = inlined_call_operand.hbm [shape: f32[2,8,32], index: 0, kind: input, shape index: {}]
  %s1 = inlined_call_operand.hbm [shape: f32[2,8,32], index: 1, kind: input, shape index: {}]
  %s2 = inlined_call_operand.hbm [shape: s32[2,1,8], index: 2, kind: input, shape index: {}]
  %s3 = inlined_call_operand.hbm [shape: f32[2,8,8], index: 3, kind: output, shape index: {0}]
  %s4 = inlined_call_operand.hbm [shape: f32[1,8,128], index: 4, kind: output, shape index: {1}]
  %5 = xla_tuple %s3, %s4
  %s6 = sld [smem:[#allocation0]]
  $region42: #{tpu_custom_call.1} parent=0
    _
  %s8 = ssub.s32 1, %s6
  %s9 = scalar_select 0, %s8, %s6
  $region1: #{tpu_custom_call.1} parent=0
    #allocation2 [shape = 'u8[8192]{0}', space=vmem, size = 0x2000, scoped, tag = 'input window, operand 0, single buffered']
    #allocation3 [shape = 's32[1]{0}', space=sflag, size = 0x4, scoped, tag = 'scoped memory for tpu_custom_call.1']
    #allocation4 [shape = 's32[1]{0}', space=sflag, size = 0x4, scoped, tag = 'scoped memory for tpu_custom_call.1']
    #allocation5 [shape = 'u8[8192]{0}', space=vmem, size = 0x2000, scoped, tag = 'input window, operand 1, single buffered']
    #allocation6 [shape = 's32[1]{0}', space=sflag, size = 0x4, scoped, tag = 'scoped memory for tpu_custom_call.1']
    #allocation7 [shape = 'u8[1024]{0}', space=vmem, size = 0x400, scoped, tag = 'input window, operand 2, single buffered']
    #allocation8 [shape = 'u8[8192]{0}', space=vmem, size = 0x2000, scoped, tag = 'output window, operand 0, single buffered']
    #allocation9 [shape = 'u8[4096]{0}', space=vmem, size = 0x1000, scoped, tag = 'output window, operand 1, single buffered']
    #allocation10 [shape = 's32[1]{0}', space=sflag, size = 0x4, scoped, tag = 'scoped memory for tpu_custom_call.1']
    %10 = vsyncpa [#allocation3], 0
    %11 = vsyncpa [#allocation6], 0
    %12 = vsyncpa [#allocation4], 0
    %13 = vsyncpa [#allocation10], 0
    // Predicated region
    $region2: #{tpu_custom_call.1} parent=1 // pred_check
      _
    $region3: #{tpu_custom_call.1} parent=1 // pred_check_branch
      %15 = sbr.rel (0) target = $region5
    $region4: #{tpu_custom_call.1} parent=1 // pred_region
      %17 = vsyncadd [#allocation3], 0
      %s18 = sshll.u32 %s0, 4
      %s19 = int_to_ptr.hbm [resolvable:$true] %s18
      %s20 = sshll.u32 [#allocation2], 4
      %s21 = int_to_ptr.vmem [resolvable:$true] %s20
      %26 = dma.hbm_to_vmem [thread:$0]  %s19, 256, %s21, [#allocation3], 128, 128, 8
    $region5: #{tpu_custom_call.1} parent=1 // pred_fallthru
      _
    // Predicated region
    $region6: #{tpu_custom_call.1} parent=1 // pred_check
      _
    $region7: #{tpu_custom_call.1} parent=1 // pred_check_branch
      %28 = sbr.rel (0) target = $region9
    $region8: #{tpu_custom_call.1} parent=1 // pred_region
      %30 = vsyncadd [#allocation6], 0
      %s31 = sshll.u32 %s1, 4
      %s32 = int_to_ptr.hbm [resolvable:$true] %s31
      %s33 = sshll.u32 [#allocation5], 4
      %s34 = int_to_ptr.vmem [resolvable:$true] %s33
      %39 = dma.hbm_to_vmem [thread:$0]  %s32, 256, %s34, [#allocation6], 128, 128, 8
    $region9: #{tpu_custom_call.1} parent=1 // pred_fallthru
      _
    // Predicated region
    $region10: #{tpu_custom_call.1} parent=1 // pred_check
      _
    $region11: #{tpu_custom_call.1} parent=1 // pred_check_branch
      %41 = sbr.rel (0) target = $region13
    $region12: #{tpu_custom_call.1} parent=1 // pred_region
      %43 = vsyncadd [#allocation6], 0
      %s44 = sshll.u32 %s2, 4
      %s45 = int_to_ptr.hbm [resolvable:$true] %s44
      %s46 = sshll.u32 [#allocation7], 4
      %s47 = int_to_ptr.vmem [resolvable:$true] %s46
      %52 = dma.hbm_to_vmem [thread:$0]  %s45, 32, %s47, [#allocation6], 16, 16, 1
    $region13: #{tpu_custom_call.1} parent=1 // pred_fallthru
      _
    // Predicated region
    $region14: #{tpu_custom_call.1} parent=1 // pred_check
      _
    $region15: #{tpu_custom_call.1} parent=1 // pred_check_branch
      %54 = sbr.rel (0) target = $region17
    $region16: #{tpu_custom_call.1} parent=1 // pred_region
      %56 = dma.done [#allocation3], 256
    $region17: #{tpu_custom_call.1} parent=1 // pred_fallthru
      _
    // Predicated region
    $region18: #{tpu_custom_call.1} parent=1 // pred_check
      _
    $region19: #{tpu_custom_call.1} parent=1 // pred_check_branch
      %58 = sbr.rel (0) target = $region21
    $region20: #{tpu_custom_call.1} parent=1 // pred_region
      %60 = dma.done [#allocation6], 256
    $region21: #{tpu_custom_call.1} parent=1 // pred_fallthru
      _
    // Predicated region
    $region22: #{tpu_custom_call.1} parent=1 // pred_check
      _
    $region23: #{tpu_custom_call.1} parent=1 // pred_check_branch
      %62 = sbr.rel (0) target = $region25
    $region24: #{tpu_custom_call.1} parent=1 // pred_region
      %64 = dma.done [#allocation6], 32
    $region25: #{tpu_custom_call.1} parent=1 // pred_fallthru
      _
    %v65 = vld [vmem:[#allocation2] sm:$0xff]
    %v66 = vld [vmem:[#allocation2 + $0x8] sm:$0xff]
    %v67 = vld [vmem:[#allocation5] sm:$0xff]
    %v68 = vld [vmem:[#allocation5 + $0x8] sm:$0xff]
    %v69 = vld [vmem:[#allocation7] sm:$0x1]
    %v70 = vld [vmem:[#allocation7 + $0x1] sm:$0x1]
    %vm71 = vcmask 261120
    %v73 = vsel %vm71, %v65, 0
    %v76 = vsel %vm71, %v67, 0
    %78 = vmatpush.xpose.msra.mxu0 0.0
    %79 = vmatpush.xpose.msra.mxu0 0.0
    %80 = vmatpush.xpose.msra.mxu0 0.0
    %81 = vmatpush.xpose.msra.mxu0 0.0
    %82 = vmatpush.xpose.msra.mxu0 0.0
    %83 = vmatpush.xpose.msra.mxu0 0.0
    %84 = vmatpush.xpose.msra.mxu0 0.0
    %85 = vmatpush.xpose.msra.mxu0 0.0
    %86 = vmatpush.xpose.msra.mxu0 0.0
    %87 = vmatpush.xpose.msra.mxu0 0.0
    %88 = vmatpush.xpose.msra.mxu0 0.0
    %89 = vmatpush.xpose.msra.mxu0 0.0
    %90 = vmatpush.xpose.msra.mxu0 0.0
    %91 = vmatpush.xpose.msra.mxu0 0.0
    %92 = vmatpush.xpose.msra.mxu0 0.0
    %93 = vmatpush.xpose.msra.mxu0 %v76
    %94 = vmatmul.f32.gmra.mxu0 %v73
    %v95 = vpop.f32.mrf.mxu0
    %v96 = vadd.f32 0.0, %v95
    %97 = vdwg.mxu0
    %v99 = vsel %vm71, %v66, 0
    %v102 = vsel %vm71, %v68, 0
    %104 = vmatpush.xpose.msra.mxu0 0.0
    %105 = vmatpush.xpose.msra.mxu0 0.0
    %106 = vmatpush.xpose.msra.mxu0 0.0
    %107 = vmatpush.xpose.msra.mxu0 0.0
    %108 = vmatpush.xpose.msra.mxu0 0.0
    %109 = vmatpush.xpose.msra.mxu0 0.0
    %110 = vmatpush.xpose.msra.mxu0 0.0
    %111 = vmatpush.xpose.msra.mxu0 0.0
    %112 = vmatpush.xpose.msra.mxu0 0.0
    %113 = vmatpush.xpose.msra.mxu0 0.0
    %114 = vmatpush.xpose.msra.mxu0 0.0
    %115 = vmatpush.xpose.msra.mxu0 0.0
    %116 = vmatpush.xpose.msra.mxu0 0.0
    %117 = vmatpush.xpose.msra.mxu0 0.0
    %118 = vmatpush.xpose.msra.mxu0 0.0
    %119 = vmatpush.xpose.msra.mxu0 %v102
    %120 = vmatmul.f32.gmra.mxu0 %v99
    %v121 = vpop.f32.mrf.mxu0
    %v122 = vadd.f32 0.0, %v121
    %123 = vdwg.mxu0
    %v124 = vlaneseq
    %v125 = vshrl.u32 %v124, 7
    %v126 = vperm.slane %v69, 0
    %v127 = vperm.slane %v70, 0
    %vm128 = vcmp.ge.s32.totalorder %v126, %v125
    %vm129 = vcmp.ge.s32.totalorder %v127, %v125
    %vm130 = vcmp.eq.s32.totalorder %v126, %v125
    %vm131 = vcmp.eq.s32.totalorder %v127, %v125
    %v132 = vsel %vm128, %v96, -1e+09
    %v133 = vsel %vm129, %v122, -1e+09
    %vm134 = vcmask 64512
    %135 = vst.msk [vmem:[#allocation8] sm:$0xff] %vm134, %v132
    %136 = vst.msk [vmem:[#allocation8 + $0x8] sm:$0xff] %vm134, %v133
    %v137 = vsel %vm134, %v132, -inf
    %138 = vmax.xlane.f32.xlu0 %v137
    %v139 = vpop.xlane.xlu0 %138
    %v140 = vsel %vm134, %v133, -inf
    %141 = vmax.xlane.f32.xlu0 %v140
    %v142 = vpop.xlane.xlu0 %141
    %v143 = vsub.f32 %v132, %v139
    %v144 = vsub.f32 %v133, %v142
    %v145 = vmul.f32 %v143, 1.442695
    %v146 = vpow.pop %v145
    %v147 = vmul.f32 %v144, 1.442695
    %v148 = vpow.pop %v147
    %v149 = vsel %vm134, %v146, 0.0
    %150 = vadd.xlane.f32.xlu0 %v149
    %v151 = vpop.xlane.xlu0 %150
    %v152 = vsel %vm134, %v148, 0.0
    %153 = vadd.xlane.f32.xlu0 %v152
    %v154 = vpop.xlane.xlu0 %153
    %v155 = vlog2.pop %v151
    %v156 = vmul.f32 %v155, 0.6931472
    %v157 = vlog2.pop %v154
    %v158 = vmul.f32 %v157, 0.6931472
    %v159 = vsel %vm130, %v143, 0.0
    %v160 = vsel %vm131, %v144, 0.0
    %v161 = vsel %vm134, %v159, 0.0
    %162 = vadd.xlane.f32.xlu0 %v161
    %v163 = vpop.xlane.xlu0 %162
    %v164 = vsel %vm134, %v160, 0.0
    %165 = vadd.xlane.f32.xlu0 %v164
    %v166 = vpop.xlane.xlu0 %165
    %v167 = vsub.f32 %v156, %v163
    %v168 = vsub.f32 %v158, %v166
    %s169 = smul.u32 0, 2
    %v170 = vstv %s169
    %v171 = vadd.s32 %v170, %v125
    %vm172 = vcmp.lt.s32.totalorder %v171, 2
    %v175 = vlaneseq
    %v176 = vand.u32 %v175, 127
    %v177 = vperm.slane %v167, %v176
    %v178 = vperm.slane %v168, %v176
    %vm179 = vcmask 1041409
    %v180 = vsel %vm179, %v178, %v177
    %v182 = vsel %vm172, %v180, 0.0
    %vm183 = vcmask 58368
    %v184 = vsel %vm183, %v182, 0.0
    %185 = vadd.xlane.f32.xlu0 %v184
    %v186 = vpop.xlane.xlu0 %185
    %v187 = vrot.slane %v186, 4
    %v188 = vadd.f32 %v186, %v187
    %v189 = vrot.slane %v188, 2
    %v190 = vadd.f32 %v188, %v189
    %v191 = vrot.slane %v190, 1
    %v192 = vadd.f32 %v190, %v191
    %s193 = vtos %v192
    %v194 = vstv %s193
    %195 = vst [vmem:[#allocation9] sm:$0xff] %v194
    // Predicated region
    $region26: #{tpu_custom_call.1} parent=1 // pred_check
      _
    $region27: #{tpu_custom_call.1} parent=1 // pred_check_branch
      %197 = sbr.rel (0) target = $region29
    $region28: #{tpu_custom_call.1} parent=1 // pred_region
      %199 = vsyncadd [#allocation4], 0
      %s200 = sshll.u32 [#allocation8], 4
      %s201 = int_to_ptr.vmem [resolvable:$true] %s200
      %s202 = sshll.u32 %s3, 4
      %s203 = int_to_ptr.hbm [resolvable:$true] %s202
      %208 = dma.vmem_to_hbm [thread:$0]  %s201, 256, %s203, [#allocation4], 128, 128, 8
    $region29: #{tpu_custom_call.1} parent=1 // pred_fallthru
      _
    // Predicated region
    $region30: #{tpu_custom_call.1} parent=1 // pred_check
      _
    $region31: #{tpu_custom_call.1} parent=1 // pred_check_branch
      %210 = sbr.rel (0) target = $region33
    $region32: #{tpu_custom_call.1} parent=1 // pred_region
      %212 = vsyncadd [#allocation10], 0
      %s214 = sshll.u32 [#allocation9], 4
      %s215 = int_to_ptr.vmem [resolvable:$true] %s214
      %s216 = sshll.u32 %s4, 4
      %s217 = int_to_ptr.hbm [resolvable:$true] %s216
      %219 = dma.vmem_to_hbm [thread:$0]  %s215, 128, %s217, [#allocation10]
    $region33: #{tpu_custom_call.1} parent=1 // pred_fallthru
      _
    // Predicated region
    $region34: #{tpu_custom_call.1} parent=1 // pred_check
      _
    $region35: #{tpu_custom_call.1} parent=1 // pred_check_branch
      %221 = sbr.rel (0) target = $region37
    $region36: #{tpu_custom_call.1} parent=1 // pred_region
      %223 = dma.done [#allocation4], 256
    $region37: #{tpu_custom_call.1} parent=1 // pred_fallthru
      _
    // Predicated region
    $region38: #{tpu_custom_call.1} parent=1 // pred_check
      _
    $region39: #{tpu_custom_call.1} parent=1 // pred_check_branch
      %225 = sbr.rel (0) target = $region41
    $region40: #{tpu_custom_call.1} parent=1 // pred_region
      %227 = dma.done [#allocation10], 128
    $region41: #{tpu_custom_call.1} parent=1 // pred_fallthru
      _
    %228 = vsyncpa [#allocation3], 1
    %229 = vsyncpa [#allocation6], 1
    %230 = vsyncpa [#allocation4], 1
    %231 = vsyncpa [#allocation10], 1

</llo_original>
